<compile_context>
chip_gen: v5e
topology: v5e:2x2
jax: 0.10.0
libtpu: 0.0.40
codegen_flags: <defaults>
</compile_context>

<pallas_src>
import functools

import jax
import jax.numpy as jnp
from jax.experimental import pallas as pl
from jax.experimental.pallas import tpu as pltpu

K = 2                 # propagation depth in each GCN_with_Sep branch (DualGNN default)
MLPA = 0.001          # scale on mlp_A branch
OFFSET_SCALE = 0.001  # scale on offset_mlp branch
NEG_INF = -1e30       # finite "-inf" for masked padded classes
LANE = 128


def _round_up(x, m):
    return (x + m - 1) // m * m


def _log_softmax_rows(z):
    """log_softmax along dim=1 (rows are nodes, columns are classes)."""
    m = jnp.max(z, axis=1, keepdims=True)
    s = z - m
    lse = jnp.log(jnp.sum(jnp.exp(s), axis=1, keepdims=True))
    return s - lse


# ---------------------------------------------------------------------------
# Kernels
# ---------------------------------------------------------------------------
def _embed_kernel(x_ref, we_ref, be_ref, h_ref):
    """Fused embedding for both branches: relu(x @ [W1e | W2e] + [b1e | b2e])."""
    h = jnp.dot(x_ref[...], we_ref[...], preferred_element_type=jnp.float32) + be_ref[...]
    h_ref[...] = jnp.maximum(h, 0.0).astype(h_ref.dtype)


def _prop_kernel(adj_ref, h_ref, c1_ref):
    """One propagation hop for both branches: C1 tile = [adj@H | adj^2@H]."""
    adj = adj_ref[...]                                        # bf16 [T, Npad]
    adj_stack = jnp.concatenate([adj, adj * adj], axis=0)     # [2T, Npad] (adj^2 in-kernel)
    m = jnp.dot(adj_stack, h_ref[...], preferred_element_type=jnp.float32)
    t = adj.shape[0]
    c1_ref[...] = jnp.concatenate([m[:t], m[t:]], axis=-1).astype(c1_ref.dtype)


def _final_kernel(adj_ref, c1_full_ref, h0_t_ref, c1_t_ref, x_ref, a_ref,
                  wA_ref, wB_ref, wCa_ref, wCb_ref, bfc_ref,
                  wo1_ref, bo1_ref, wo2_ref, bo2_ref,
                  wa1_ref, ba1_ref, wa2_ref, ba2_ref,
                  out_ref, *, n_classes, cpad):
    """Hop 2 + sliced-weight logit accumulation + MLP heads + log_softmaxes."""
    adj = adj_ref[...]                                        # bf16 [T, Npad]
    adj_stack = jnp.concatenate([adj, adj * adj], axis=0)     # [2T, Npad]
    m2 = jnp.dot(adj_stack, c1_full_ref[...],
                 preferred_element_type=jnp.float32)          # [2T, 4H] f32
    t = adj.shape[0]

    h0_t = h0_t_ref[...].astype(jnp.float32)                  # [T, 2H]
    c1_t = c1_t_ref[...].astype(jnp.float32)                  # [T, 4H]

    # Logits for BOTH branches at once ([:, :cpad] = branch1, [:, cpad:] = branch2);
    # w_fc slices were packed host-side so no hidden_reps concat is needed.
    logits = (bfc_ref[...]
              + jnp.dot(h0_t, wA_ref[...], preferred_element_type=jnp.float32)
              + jnp.dot(c1_t, wB_ref[...], preferred_element_type=jnp.float32)
              + jnp.dot(m2[:t], wCa_ref[...], preferred_element_type=jnp.float32)
              + jnp.dot(m2[t:], wCb_ref[...], preferred_element_type=jnp.float32))

    mask = jax.lax.broadcasted_iota(jnp.int32, (t, cpad), 1) < n_classes
    x1 = _log_softmax_rows(jnp.where(mask, logits[:, :cpad], NEG_INF))
    x2 = _log_softmax_rows(jnp.where(mask, logits[:, cpad:], NEG_INF))

    # offset_mlp: Linear -> ReLU -> Linear (classes zero-padded to cpad)
    x_t = x_ref[...]
    h_off = jnp.maximum(
        jnp.dot(x_t, wo1_ref[...], preferred_element_type=jnp.float32) + bo1_ref[...], 0.0)
    x_off = jnp.dot(h_off, wo2_ref[...], preferred_element_type=jnp.float32) + bo2_ref[...]

    # mlp_A: Linear -> ReLU -> Linear
    a_t = a_ref[...]
    h_a = jnp.maximum(
        jnp.dot(a_t, wa1_ref[...], preferred_element_type=jnp.float32) + ba1_ref[...], 0.0)
    x_a = jnp.dot(h_a, wa2_ref[...], preferred_element_type=jnp.float32) + ba2_ref[...]

    z = x1 + x2 + OFFSET_SCALE * x_off + MLPA * x_a
    z = jnp.where(mask, z, NEG_INF)
    out_ref[...] = _log_softmax_rows(z)


# ---------------------------------------------------------------------------
# Wrapper
# ---------------------------------------------------------------------------
def dual_gnn(x, adj, A, params):
    N, F = x.shape
    H = params["w1_embed"].shape[1]
    C = params["w1_fc"].shape[1]
    a_dim = A.shape[1]

    f32, bf16 = jnp.float32, jnp.bfloat16
    cpad = _round_up(C, LANE)

    # --- tile sizing (budgeted for v7x: 64 MiB physical VMEM) -----------------
    n8 = _round_up(N, 8)
    tile_n = min(128, n8)
    # keep ~4 live bf16 adjacency row tiles (double-buffer + in-kernel stack) <= 24 MiB
    while 4 * tile_n * _round_up(N, tile_n) * 2 > 24 * 1024 * 1024 and tile_n > 8:
        tile_n = max(8, tile_n // 2)
    n_pad = _round_up(N, tile_n)
    grid = (n_pad // tile_n,)

    adj_tile_bytes = tile_n * n_pad * 2
    vmem_bytes = int(min(48 * 1024 * 1024,                       # headroom under v7x 64 MiB
                         max(16 * 1024 * 1024,
                             8 * adj_tile_bytes + 8 * n_pad * H + (1 << 22))))
    cp = pltpu.CompilerParams(dimension_semantics=("parallel",),
                              vmem_limit_bytes=vmem_bytes)

    # --- host-side packing (one-time, cheap) -----------------------------------
    # Pad node dim; padded adjacency rows/cols are zero so real rows are unaffected,
    # padded output rows are sliced off at the end.
    x_p = jnp.zeros((n_pad, F), f32).at[:N].set(x.astype(f32))
    adj_p = jnp.zeros((n_pad, n_pad), bf16).at[:N, :N].set(adj.astype(bf16))
    a_pad_dim = _round_up(max(a_dim, 8), 8)
    A_p = jnp.zeros((n_pad, a_pad_dim), f32).at[:N, :a_dim].set(A.astype(f32))

    # Fuse both branch embeddings into one matmul: x @ [W1e | W2e].
    w_e = jnp.concatenate([params["w1_embed"], params["w2_embed"]], axis=1).astype(f32)
    b_e = jnp.concatenate([params["b1_embed"], params["b2_embed"]], axis=1).astype(f32)

    def pad_cols(w, width):
        w = w.astype(f32)
        return jnp.pad(w, ((0, 0), (0, width - w.shape[1])))

    def blockdiag(wa, wb):
        top = jnp.concatenate([pad_cols(wa, cpad), jnp.zeros((wa.shape[0], cpad), f32)], 1)
        bot = jnp.concatenate([jnp.zeros((wb.shape[0], cpad), f32), pad_cols(wb, cpad)], 1)
        return jnp.concatenate([top, bot], axis=0)

    w1, w2 = params["w1_fc"].astype(f32), params["w2_fc"].astype(f32)
    # hf = [h, cur1, cur2]  ->  logits accumulated against sliced fc weights.
    # Row layouts match the fused activations produced by the kernels:
    #   H0cat  = [H0_1 | H0_2]
    #   C1cat  = [adj@H0_1 | adj@H0_2 | adj2@H0_1 | adj2@H0_2]
    #   M2a    = adj @C1cat ,  M2b = adj2 @ C1cat
    w_A = blockdiag(w1[0:H], w2[0:H])
    w_B = jnp.concatenate([blockdiag(w1[H:2 * H], w2[H:2 * H]),
                           blockdiag(w1[2 * H:3 * H], w2[2 * H:3 * H])], axis=0)
    w_Ca = jnp.concatenate([blockdiag(w1[3 * H:4 * H], w2[3 * H:4 * H]),
                            blockdiag(w1[4 * H:5 * H], w2[4 * H:5 * H])], axis=0)
    w_Cb = jnp.concatenate([blockdiag(w1[5 * H:6 * H], w2[5 * H:6 * H]),
                            blockdiag(w1[6 * H:7 * H], w2[6 * H:7 * H])], axis=0)
    b_fc = jnp.concatenate([pad_cols(params["b1_fc"], cpad),
                            pad_cols(params["b2_fc"], cpad)], axis=1)

    wo1 = params["wo1"].astype(f32)
    bo1 = params["bo1"].astype(f32)
    wo2 = pad_cols(params["wo2"], cpad)
    bo2 = pad_cols(params["bo2"], cpad)
    wa1 = jnp.zeros((a_pad_dim, params["wa1"].shape[1]), f32).at[:a_dim].set(
        params["wa1"].astype(f32))
    ba1 = params["ba1"].astype(f32)
    wa2 = pad_cols(params["wa2"], cpad)
    ba2 = pad_cols(params["ba2"], cpad)

    def tiled(cols):
        return pl.BlockSpec((tile_n, cols), lambda i: (i, 0))

    def whole(arr):
        return pl.BlockSpec(arr.shape, lambda i: (0,) * arr.ndim)

    # --- call 1: fused embeddings for all nodes (row-tiled, parallel) ----------
    h0 = pl.pallas_call(
        _embed_kernel,
        out_shape=jax.ShapeDtypeStruct((n_pad, 2 * H), bf16),
        grid_spec=pltpu.PrefetchScalarGridSpec(
            num_scalar_prefetch=0, grid=grid,
            in_specs=[tiled(F), whole(w_e), whole(b_e)],
            out_specs=tiled(2 * H)),
        compiler_params=cp,
    )(x_p, w_e, b_e)

    # --- call 2: hop 1 (adjacency streamed in row tiles, bf16) ------------------
    c1 = pl.pallas_call(
        _prop_kernel,
        out_shape=jax.ShapeDtypeStruct((n_pad, 4 * H), bf16),
        grid_spec=pltpu.PrefetchScalarGridSpec(
            num_scalar_prefetch=0, grid=grid,
            in_specs=[tiled(n_pad), whole(h0)],
            out_specs=tiled(4 * H)),
        compiler_params=cp,
    )(adj_p, h0)

    # --- call 3: hop 2 + fc accumulation + MLP heads + log_softmaxes ------------
    kernel = functools.partial(_final_kernel, n_classes=C, cpad=cpad)
    out_p = pl.pallas_call(
        kernel,
        out_shape=jax.ShapeDtypeStruct((n_pad, cpad), f32),
        grid_spec=pltpu.PrefetchScalarGridSpec(
            num_scalar_prefetch=0, grid=grid,
            in_specs=[tiled(n_pad),        # adj row tile
                      whole(c1),           # C1 of all nodes (hop-2 RHS)
                      tiled(2 * H),        # H0 rows of this tile
                      tiled(4 * H),        # C1 rows of this tile
                      tiled(F),            # x rows of this tile (offset_mlp)
                      tiled(a_pad_dim),    # A rows of this tile (mlp_A)
                      whole(w_A), whole(w_B), whole(w_Ca), whole(w_Cb), whole(b_fc),
                      whole(wo1), whole(bo1), whole(wo2), whole(bo2),
                      whole(wa1), whole(ba1), whole(wa2), whole(ba2)],
            out_specs=tiled(cpad)),
        compiler_params=cp,
    )(adj_p, c1, h0, c1, x_p, A_p,
      w_A, w_B, w_Ca, w_Cb, b_fc, wo1, bo1, wo2, bo2, wa1, ba1, wa2, ba2)

    return out_p[:N, :C]


# ---------------------------------------------------------------------------
# Pure-JAX f32 reference (mirrors the PyTorch forward) for a correctness check.
# ---------------------------------------------------------------------------
def _ref_gcn(x, adj, adj2, we, be, wf, bf):
    h = jax.nn.relu(x @ we + be)
    reps = [h]
    cur = h
    for _ in range(K):
        cur = jnp.concatenate([adj @ cur, adj2 @ cur], axis=-1)
        reps.append(cur)
    hf = jnp.concatenate(reps, axis=-1)
    return jax.nn.log_softmax(hf @ wf + bf, axis=1)


def dual_gnn_ref(x, adj, A, p):
    adj2 = adj * adj
    x1 = _ref_gcn(x, adj, adj2, p["w1_embed"], p["b1_embed"], p["w1_fc"], p["b1_fc"])
    x2 = _ref_gcn(x, adj, adj2, p["w2_embed"], p["b2_embed"], p["w2_fc"], p["b2_fc"])
    x_off = jax.nn.relu(x @ p["wo1"] + p["bo1"]) @ p["wo2"] + p["bo2"]
    x_a = jax.nn.relu(A @ p["wa1"] + p["ba1"]) @ p["wa2"] + p["ba2"]
    out = x1 + x2 + OFFSET_SCALE * x_off + MLPA * x_a
    return jax.nn.log_softmax(out, axis=1)


def init_params(key, input_dim, hidden_dim, output_dim, a_dim):
    fc_in = hidden_dim * (2 ** (K + 1) - 1)        # 7 * hidden for K=2
    shapes = {
        "w1_embed": (input_dim, hidden_dim), "b1_embed": (1, hidden_dim),
        "w1_fc": (fc_in, output_dim),        "b1_fc": (1, output_dim),
        "w2_embed": (input_dim, hidden_dim), "b2_embed": (1, hidden_dim),
        "w2_fc": (fc_in, output_dim),        "b2_fc": (1, output_dim),
        "wo1": (input_dim, 2 * hidden_dim),  "bo1": (1, 2 * hidden_dim),
        "wo2": (2 * hidden_dim, output_dim), "bo2": (1, output_dim),
        "wa1": (a_dim, 2 * hidden_dim),      "ba1": (1, 2 * hidden_dim),
        "wa2": (2 * hidden_dim, output_dim), "ba2": (1, output_dim),
    }
    params = {}
    for name, shape in sorted(shapes.items()):
        key, sub = jax.random.split(key)
        params[name] = (0.1 * jax.random.normal(sub, shape)).astype(jnp.float32)
    return params


if __name__ == "__main__":
    # Small synthetic graph (exercises a 2-step row-tile grid at TILE_N=128).
    N, input_dim, hidden_dim, output_dim, a_dim = 256, 64, 8, 4, 1

    key = jax.random.PRNGKey(0)
    kx, kadj, ka, kp = jax.random.split(key, 4)

    x = jax.random.normal(kx, (N, input_dim), dtype=jnp.float32)
    adj_raw = jax.random.uniform(kadj, (N, N), dtype=jnp.float32)
    adj_bin = ((adj_raw + adj_raw.T) > 1.4).astype(jnp.float32)
    adj_bin = jnp.maximum(adj_bin, jnp.eye(N, dtype=jnp.float32))   # self loops
    adj = adj_bin / jnp.sum(adj_bin, axis=1, keepdims=True)         # row-normalized adjacency
    A = jax.random.normal(ka, (N, a_dim), dtype=jnp.float32)

    params = init_params(kp, input_dim, hidden_dim, output_dim, a_dim)

    out = jax.block_until_ready(dual_gnn(x, adj, A, params))
    ref = dual_gnn_ref(x, adj, A, params)

    assert out.shape == (N, output_dim)
    err = float(jnp.max(jnp.abs(out - ref)))
    # bf16 adjacency / activation streams loosen the tolerance vs the f32 reference.
    assert err < 5e-2, f"mismatch vs pure-JAX reference: max abs err {err}"

    print("KERNEL_OK")
</pallas_src>

<mosaic_0001>
module attributes {stable_mosaic.version = 11 : i64} {
  func.func @_embed_kernel(%arg0: i32, %arg1: memref<128x64xf32, #tpu.memory_space<vmem>>, %arg2: memref<64x16xf32, #tpu.memory_space<vmem>>, %arg3: memref<1x16xf32, #tpu.memory_space<vmem>>, %arg4: memref<128x16xbf16, #tpu.memory_space<vmem>>) attributes {dimension_semantics = [#tpu.dimension_semantics<parallel>], iteration_bounds = array<i64: 2>, scalar_prefetch = 0 : i64, scratch_operands = 0 : i64, tpu.core_type = #tpu.core_type<tc>, window_params = [{transform_indices = @transform_0, window_bounds = array<i64: 128, 64>}, {pipeline_mode = #tpu.pipeline_mode<synchronous>, transform_indices = @transform_1, window_bounds = array<i64: 64, 16>}, {pipeline_mode = #tpu.pipeline_mode<synchronous>, transform_indices = @transform_2, window_bounds = array<i64: 1, 16>}, {transform_indices = @transform_3, window_bounds = array<i64: 128, 16>}]} {
    %c0 = arith.constant 0 : index
    %c0_0 = arith.constant 0 : index
    %0 = vector.load %arg1[%c0, %c0_0] : memref<128x64xf32, #tpu.memory_space<vmem>>, vector<128x64xf32>
    %c0_1 = arith.constant 0 : index
    %c0_2 = arith.constant 0 : index
    %1 = vector.load %arg2[%c0_1, %c0_2] : memref<64x16xf32, #tpu.memory_space<vmem>>, vector<64x16xf32>
    %cst = arith.constant dense<0.000000e+00> : vector<128x16xf32>
    %2 = tpu.matmul %0, %1, %cst {dimension_numbers = #tpu.dot_dimension_numbers<[1], [0], [0], [1], [0, 0, 1, 1], [], []>} : vector<128x64xf32>, vector<64x16xf32>, vector<128x16xf32> -> vector<128x16xf32>
    %c0_3 = arith.constant 0 : index
    %c0_4 = arith.constant 0 : index
    %3 = vector.load %arg3[%c0_3, %c0_4] : memref<1x16xf32, #tpu.memory_space<vmem>>, vector<1x16xf32>
    %4 = vector.broadcast %3 : vector<1x16xf32> to vector<128x16xf32>
    %5 = arith.addf %2, %4 : vector<128x16xf32>
    %cst_5 = arith.constant 0.000000e+00 : f32
    %6 = vector.broadcast %cst_5 : f32 to vector<128x16xf32>
    %7 = arith.maximumf %5, %6 : vector<128x16xf32>
    %8 = arith.truncf %7 : vector<128x16xf32> to vector<128x16xbf16>
    %c0_6 = arith.constant 0 : index
    %c0_7 = arith.constant 0 : index
    %9 = vector.load %arg4[%c0_6, %c0_7] : memref<128x16xbf16, #tpu.memory_space<vmem>>, vector<128x16xbf16>
    tpu.vector_store %arg4[%c0_6, %c0_7], %8 {strides = array<i32>} : memref<128x16xbf16, #tpu.memory_space<vmem>>, vector<128x16xbf16>,
    return
  }
  func.func @transform_0(%arg0: i32) -> (i32, i32) {
    %c0_i32 = arith.constant 0 : i32
    %c0_i32_0 = arith.constant 0 : i32
    return %arg0, %c0_i32 : i32, i32
  }
  func.func @transform_1(%arg0: i32) -> (i32, i32) {
    %c0_i32 = arith.constant 0 : i32
    %c0_i32_0 = arith.constant 0 : i32
    %c0_i32_1 = arith.constant 0 : i32
    return %c0_i32, %c0_i32_0 : i32, i32
  }
  func.func @transform_2(%arg0: i32) -> (i32, i32) {
    %c0_i32 = arith.constant 0 : i32
    %c0_i32_0 = arith.constant 0 : i32
    %c0_i32_1 = arith.constant 0 : i32
    return %c0_i32, %c0_i32_0 : i32, i32
  }
  func.func @transform_3(%arg0: i32) -> (i32, i32) {
    %c0_i32 = arith.constant 0 : i32
    %c0_i32_0 = arith.constant 0 : i32
    return %arg0, %c0_i32 : i32, i32
  }
}

</mosaic_0001>

<llo_original>
// kernel: tpu_custom_call.1
$region0: #{tpu_custom_call.1}
  #allocation0 [shape = 'u32[]', space=smem, size = 0x4, offset = 0x4, fixed_abs, tag = 'smem constant byte address 0x4 - core index']
  #allocation1 [shape = 'u32[72,128]{1,0:T(1,128)}', space=vmem, size = 0x9000, scoped, tag = 'internal scratch']
  %s0 = inlined_call_operand.vmem [shape: f32[256,64], index: 0, kind: input, shape index: {}]
  %s1 = inlined_call_operand.vmem [shape: f32[64,16], index: 1, kind: input, shape index: {}]
  %s2 = inlined_call_operand.vmem [shape: f32[1,16], index: 2, kind: input, shape index: {}]
  %s3 = inlined_call_operand.vmem [shape: bf16[256,16], index: 3, kind: output, shape index: {}]
  %s4 = sld [smem:[#allocation0]]
  $region45: #{tpu_custom_call.1} parent=0
    _
  %s6 = ssub.s32 1, %s4
  %s7 = scalar_select 0, %s6, %s4
  loop: start=0, step=1, limit=4
  $region2: #{tpu_custom_call.1} parent=0 // loop_pre_header
    _
  $region3: #{tpu_custom_call.1} parent=0 // loop_header
    %s9 = sphi 0, %s13
    %p10 = scmp.ge.s32.totalorder %s9, 4
    %s19 = sphi 0, %s21
    %s22 = sphi 0, %s19
    %s23 = sphi 0, %s22
    %s39 = sphi 0, %s23
    %s43 = sphi 0, %s43
    %s45 = sphi 0, %s43
    %s46 = sphi 0, %s45
    %s60 = sphi 0, %s46
    %s64 = sphi 0, %s64
    %s66 = sphi 0, %s64
    %s67 = sphi 0, %s66
    %s81 = sphi 0, %s67
    %s87 = sphi 0, %s89
    %s90 = sphi 0, %s87
    %s91 = sphi 0, %s90
    %s107 = sphi 0, %s91
  $region4: #{tpu_custom_call.1} parent=0 // loop_header_branch
    %12 = sbr.rel (%p10) target = $region8
  $region5: #{tpu_custom_call.1} parent=0 // loop_body
    %s14 = ssub.s32 %s9, 1
    %s15 = ssub.s32 %s9, 2
    %s16 = sadd.s32 %s9, 1
    %s17 = ssub.s32 %s9, %s16
    %p18 = scmp.eq.s32.totalorder %s17, 0
    %s20 = sadd.s32 %s19, 1
    %s21 = scalar_select %p18, %s19, %s20
    %p24 = pneg %p18
    %p25 = scmp.eq.s32.totalorder %s9, 1
    %p26 = por %p24, %p25
    %p27 = scmp.ne.s32.totalorder %s19, %s22
    %p28 = scmp.eq.s32.totalorder %s9, 0
    %p29 = por %p27, %p28
    %p30 = scmp.ne.s32.totalorder %s19, %s22
    %p31 = scmp.eq.s32.totalorder %s14, 1
    %p32 = por %p30, %p31
    %p33 = scmp.ne.s32.totalorder %s22, %s23
    %p34 = scmp.eq.s32.totalorder %s14, 0
    %p35 = por %p33, %p34
    %p36 = scmp.ne.s32.totalorder %s22, %s23
    %p37 = scmp.eq.s32.totalorder %s15, 1
    %p38 = por %p36, %p37
    %p40 = scmp.ne.s32.totalorder %s23, %s39
    %p41 = scmp.eq.s32.totalorder %s15, 0
    %p42 = por %p40, %p41
    %s44 = sadd.s32 %s43, 1
    %p47 = scmp.eq.s32.totalorder %s9, 1
    %p48 = scmp.ne.s32.totalorder %s43, %s45
    %p49 = scmp.eq.s32.totalorder %s9, 0
    %p50 = por %p48, %p49
    %p51 = scmp.ne.s32.totalorder %s43, %s45
    %p52 = scmp.eq.s32.totalorder %s14, 1
    %p53 = por %p51, %p52
    %p54 = scmp.ne.s32.totalorder %s45, %s46
    %p55 = scmp.eq.s32.totalorder %s14, 0
    %p56 = por %p54, %p55
    %p57 = scmp.ne.s32.totalorder %s45, %s46
    %p58 = scmp.eq.s32.totalorder %s15, 1
    %p59 = por %p57, %p58
    %p61 = scmp.ne.s32.totalorder %s46, %s60
    %p62 = scmp.eq.s32.totalorder %s15, 0
    %p63 = por %p61, %p62
    %s65 = sadd.s32 %s64, 1
    %p68 = scmp.eq.s32.totalorder %s9, 1
    %p69 = scmp.ne.s32.totalorder %s64, %s66
    %p70 = scmp.eq.s32.totalorder %s9, 0
    %p71 = por %p69, %p70
    %p72 = scmp.ne.s32.totalorder %s64, %s66
    %p73 = scmp.eq.s32.totalorder %s14, 1
    %p74 = por %p72, %p73
    %p75 = scmp.ne.s32.totalorder %s66, %s67
    %p76 = scmp.eq.s32.totalorder %s14, 0
    %p77 = por %p75, %p76
    %p78 = scmp.ne.s32.totalorder %s66, %s67
    %p79 = scmp.eq.s32.totalorder %s15, 1
    %p80 = por %p78, %p79
    %p82 = scmp.ne.s32.totalorder %s67, %s81
    %p83 = scmp.eq.s32.totalorder %s15, 0
    %p84 = por %p82, %p83
    %s85 = ssub.s32 %s9, %s16
    %p86 = scmp.eq.s32.totalorder %s85, 0
    %s88 = sadd.s32 %s87, 1
    %s89 = scalar_select %p86, %s87, %s88
    %p92 = pneg %p86
    %p93 = scmp.eq.s32.totalorder %s9, 1
    %p94 = por %p92, %p93
    %p95 = scmp.ne.s32.totalorder %s87, %s90
    %p96 = scmp.eq.s32.totalorder %s9, 0
    %p97 = por %p95, %p96
    %p98 = scmp.ne.s32.totalorder %s87, %s90
    %p99 = scmp.eq.s32.totalorder %s14, 1
    %p100 = por %p98, %p99
    %p101 = scmp.ne.s32.totalorder %s90, %s91
    %p102 = scmp.eq.s32.totalorder %s14, 0
    %p103 = por %p101, %p102
    %p104 = scmp.ne.s32.totalorder %s90, %s91
    %p105 = scmp.eq.s32.totalorder %s15, 1
    %p106 = por %p104, %p105
    %p108 = scmp.ne.s32.totalorder %s91, %s107
    %p109 = scmp.eq.s32.totalorder %s15, 0
    %p110 = por %p108, %p109
    %p111 = scmp.le.s32.totalorder 1, %s9
    %p112 = scmp.lt.s32.totalorder %s9, 3
    %p113 = pnand %p111, %p112
    %p114 = pneg %p113
    // Predicated region
    $region9: #{tpu_custom_call.1} parent=5 // pred_check
      _
    $region10: #{tpu_custom_call.1} parent=5 // pred_check_branch
      %116 = sbr.rel (%p113) target = $region12
    $region11: #{tpu_custom_call.1} parent=5 // pred_region
      %s117 = ssub.s32 %s9, 1
      // Predicated region
      $region13: #{tpu_custom_call.1} parent=11 // pred_check
        %p118 = pneg %p56
      $region14: #{tpu_custom_call.1} parent=11 // pred_check_branch
        %120 = sbr.rel (%p118) target = $region16
      $region15: #{tpu_custom_call.1} parent=11 // pred_region
        _
      $region16: #{tpu_custom_call.1} parent=11 // pred_fallthru
        _
      // Predicated region
      $region17: #{tpu_custom_call.1} parent=11 // pred_check
        %p121 = pneg %p77
      $region18: #{tpu_custom_call.1} parent=11 // pred_check_branch
        %123 = sbr.rel (%p121) target = $region20
      $region19: #{tpu_custom_call.1} parent=11 // pred_region
        _
      $region20: #{tpu_custom_call.1} parent=11 // pred_fallthru
        _
    $region12: #{tpu_custom_call.1} parent=5 // pred_fallthru
      _
    %p124 = scmp.lt.s32.totalorder %s9, 2
    // Predicated region
    $region21: #{tpu_custom_call.1} parent=5 // pred_check
      %p125 = pneg %p124
    $region22: #{tpu_custom_call.1} parent=5 // pred_check_branch
      %127 = sbr.rel (%p125) target = $region24
    $region23: #{tpu_custom_call.1} parent=5 // pred_region
      // Predicated region
      $region25: #{tpu_custom_call.1} parent=23 // pred_check
        %p128 = pneg %p29
      $region26: #{tpu_custom_call.1} parent=23 // pred_check_branch
        %130 = sbr.rel (%p128) target = $region28
      $region27: #{tpu_custom_call.1} parent=23 // pred_region
        %s131 = smul.u32 16, %s9
        %p132 = scmp.lt.s32.totalorder %s131, 31
        %s133 = scalar_select %p132, %s131, 31
        %s134 = smul.addr %s133, 8
        %s135 = scalar_lea.vmem %s0, %s134
        %s136 = smul.u32 16, %s9
      $region28: #{tpu_custom_call.1} parent=23 // pred_fallthru
        _
    $region24: #{tpu_custom_call.1} parent=5 // pred_fallthru
      _
    %p137 = scmp.le.s32.totalorder 1, %s9
    %p138 = scmp.lt.s32.totalorder %s9, 3
    %p139 = pnand %p137, %p138
    %p140 = pneg %p139
    // Predicated region
    $region29: #{tpu_custom_call.1} parent=5 // pred_check
      _
    $region30: #{tpu_custom_call.1} parent=5 // pred_check_branch
      %142 = sbr.rel (%p139) target = $region32
    $region31: #{tpu_custom_call.1} parent=5 // pred_region
      %s143 = ssub.s32 %s9, 1
      %s144 = smul.u32 16, %s14
      %p145 = scmp.lt.s32.totalorder %s144, 31
      %s146 = scalar_select %p145, %s144, 31
      %s147 = smul.addr %s146, 8
      %s148 = scalar_lea.vmem %s0, %s147
      %p149 = pneg %p35
      %p150 = pneg %p32
      %p151 = pneg %p56
      %p152 = pneg %p53
      %p153 = pneg %p77
      %p154 = pneg %p74
      %p155 = pneg %p103
      %p156 = pneg %p100
      %s157 = smul.u32 16, %s14
      %p158 = scmp.lt.s32.totalorder %s157, 31
      %s159 = scalar_select %p158, %s157, 31
      %s160 = smul.addr %s159, 4
      %s161 = scalar_lea.vmem %s3, %s160
      %s162 = smul.u32 16, %s14
      %p163 = scmp.lt.s32.totalorder %s162, 31
      %s164 = scalar_select %p163, %s162, 31
      %s165 = smul.addr %s164, 8
      %s166 = scalar_lea.vmem %s0, %s165
      %s167 = smul.u32 16, %s14
      %s168 = smul.u32 16, %s14
      %p169 = scmp.lt.s32.totalorder %s168, 31
      %s170 = scalar_select %p169, %s168, 31
      %s171 = smul.addr %s170, 4
      %s172 = scalar_lea.vmem %s3, %s171
      %s173 = smul.u32 16, %s14
      %v174 = vld [vmem:[%s166] sm:$0xff]
      %v175 = vld [vmem:[%s166 + $0x8] sm:$0xff]
      %v176 = vld [vmem:[%s166 + $0x10] sm:$0xff]
      %v177 = vld [vmem:[%s166 + $0x18] sm:$0xff]
      %v178 = vld [vmem:[%s166 + $0x20] sm:$0xff]
      %v179 = vld [vmem:[%s166 + $0x28] sm:$0xff]
      %v180 = vld [vmem:[%s166 + $0x30] sm:$0xff]
      %v181 = vld [vmem:[%s166 + $0x38] sm:$0xff]
      %v182 = vld [vmem:[%s166 + $0x40] sm:$0xff]
      %v183 = vld [vmem:[%s166 + $0x48] sm:$0xff]
      %v184 = vld [vmem:[%s166 + $0x50] sm:$0xff]
      %v185 = vld [vmem:[%s166 + $0x58] sm:$0xff]
      %v186 = vld [vmem:[%s166 + $0x60] sm:$0xff]
      %v187 = vld [vmem:[%s166 + $0x68] sm:$0xff]
      %v188 = vld [vmem:[%s166 + $0x70] sm:$0xff]
      %v189 = vld [vmem:[%s166 + $0x78] sm:$0xff]
      %v190 = vld [vmem:[%s1] sm:$0xff]
      %v191 = vld [vmem:[%s1 + $0x8] sm:$0xff]
      %v192 = vld [vmem:[%s1 + $0x10] sm:$0xff]
      %v193 = vld [vmem:[%s1 + $0x18] sm:$0xff]
      %v194 = vld [vmem:[%s1 + $0x20] sm:$0xff]
      %v195 = vld [vmem:[%s1 + $0x28] sm:$0xff]
      %v196 = vld [vmem:[%s1 + $0x30] sm:$0xff]
      %v197 = vld [vmem:[%s1 + $0x38] sm:$0xff]
      %v198 = vld [vmem:[%s2] sm:$0x1]
      %v200 = vperm.slane %v198, 0
      %vm202 = vcmask 523264
      %v204 = vsel %vm202, %v174, 0
      %v207 = vsel %vm202, %v175, 0
      %v210 = vsel %vm202, %v176, 0
      %v213 = vsel %vm202, %v177, 0
      %v216 = vsel %vm202, %v178, 0
      %v219 = vsel %vm202, %v179, 0
      %v222 = vsel %vm202, %v180, 0
      %v225 = vsel %vm202, %v181, 0
      %v228 = vsel %vm202, %v182, 0
      %v231 = vsel %vm202, %v183, 0
      %v234 = vsel %vm202, %v184, 0
      %v237 = vsel %vm202, %v185, 0
      %v240 = vsel %vm202, %v186, 0
      %v243 = vsel %vm202, %v187, 0
      %v246 = vsel %vm202, %v188, 0
      %v249 = vsel %vm202, %v189, 0
      %251 = vmatpush.msra.mxu0 0.0
      %252 = vmatpush.msra.mxu0 0.0
      %253 = vmatpush.msra.mxu0 0.0
      %254 = vmatpush.msra.mxu0 0.0
      %255 = vmatpush.msra.mxu0 0.0
      %256 = vmatpush.msra.mxu0 0.0
      %257 = vmatpush.msra.mxu0 0.0
      %258 = vmatpush.msra.mxu0 0.0
      %259 = vmatpush.msra.mxu0 %v197
      %260 = vmatpush.msra.mxu0 %v196
      %261 = vmatpush.msra.mxu0 %v195
      %262 = vmatpush.msra.mxu0 %v194
      %263 = vmatpush.msra.mxu0 %v193
      %264 = vmatpush.msra.mxu0 %v192
      %265 = vmatpush.msra.mxu0 %v191
      %266 = vmatpush.msra.mxu0 %v190
      %267 = vmatmul.f32.gmra.mxu0 %v204
      %v268 = vpop.f32.mrf.mxu0
      %v269 = vadd.f32 %v200, %v268
      %270 = vmatmul.f32.gmra.mxu0 %v207
      %v271 = vpop.f32.mrf.mxu0
      %v272 = vadd.f32 %v200, %v271
      %273 = vmatmul.f32.gmra.mxu0 %v210
      %v274 = vpop.f32.mrf.mxu0
      %v275 = vadd.f32 %v200, %v274
      %276 = vmatmul.f32.gmra.mxu0 %v213
      %v277 = vpop.f32.mrf.mxu0
      %v278 = vadd.f32 %v200, %v277
      %279 = vmatmul.f32.gmra.mxu0 %v216
      %v280 = vpop.f32.mrf.mxu0
      %v281 = vadd.f32 %v200, %v280
      %282 = vmatmul.f32.gmra.mxu0 %v219
      %v283 = vpop.f32.mrf.mxu0
      %v284 = vadd.f32 %v200, %v283
      %285 = vmatmul.f32.gmra.mxu0 %v222
      %v286 = vpop.f32.mrf.mxu0
      %v287 = vadd.f32 %v200, %v286
      %288 = vmatmul.f32.gmra.mxu0 %v225
      %v289 = vpop.f32.mrf.mxu0
      %v290 = vadd.f32 %v200, %v289
      %291 = vmatmul.f32.gmra.mxu0 %v228
      %v292 = vpop.f32.mrf.mxu0
      %v293 = vadd.f32 %v200, %v292
      %294 = vmatmul.f32.gmra.mxu0 %v231
      %v295 = vpop.f32.mrf.mxu0
      %v296 = vadd.f32 %v200, %v295
      %297 = vmatmul.f32.gmra.mxu0 %v234
      %v298 = vpop.f32.mrf.mxu0
      %v299 = vadd.f32 %v200, %v298
      %300 = vmatmul.f32.gmra.mxu0 %v237
      %v301 = vpop.f32.mrf.mxu0
      %v302 = vadd.f32 %v200, %v301
      %303 = vmatmul.f32.gmra.mxu0 %v240
      %v304 = vpop.f32.mrf.mxu0
      %v305 = vadd.f32 %v200, %v304
      %306 = vmatmul.f32.gmra.mxu0 %v243
      %v307 = vpop.f32.mrf.mxu0
      %v308 = vadd.f32 %v200, %v307
      %309 = vmatmul.f32.gmra.mxu0 %v246
      %v310 = vpop.f32.mrf.mxu0
      %v311 = vadd.f32 %v200, %v310
      %312 = vmatmul.f32.gmra.mxu0 %v249
      %v313 = vpop.f32.mrf.mxu0
      %v314 = vadd.f32 %v200, %v313
      %315 = vdwg.mxu0
      %v316 = vmax.f32 %v269, 0.0
      %v317 = vmax.f32 %v272, 0.0
      %v318 = vmax.f32 %v275, 0.0
      %v319 = vmax.f32 %v278, 0.0
      %v320 = vmax.f32 %v281, 0.0
      %v321 = vmax.f32 %v284, 0.0
      %v322 = vmax.f32 %v287, 0.0
      %v323 = vmax.f32 %v290, 0.0
      %v324 = vmax.f32 %v293, 0.0
      %v325 = vmax.f32 %v296, 0.0
      %v326 = vmax.f32 %v299, 0.0
      %v327 = vmax.f32 %v302, 0.0
      %v328 = vmax.f32 %v305, 0.0
      %v329 = vmax.f32 %v308, 0.0
      %v330 = vmax.f32 %v311, 0.0
      %v331 = vmax.f32 %v314, 0.0
      %v332 = vpack.c.bf16 %v316, %v316
      %v333 = vpack.c.bf16 %v317, %v317
      %v334 = vpack.c.bf16 %v318, %v318
      %v335 = vpack.c.bf16 %v319, %v319
      %v336 = vpack.c.bf16 %v320, %v320
      %v337 = vpack.c.bf16 %v321, %v321
      %v338 = vpack.c.bf16 %v322, %v322
      %v339 = vpack.c.bf16 %v323, %v323
      %v340 = vpack.c.bf16 %v324, %v324
      %v341 = vpack.c.bf16 %v325, %v325
      %v342 = vpack.c.bf16 %v326, %v326
      %v343 = vpack.c.bf16 %v327, %v327
      %v344 = vpack.c.bf16 %v328, %v328
      %v345 = vpack.c.bf16 %v329, %v329
      %v346 = vpack.c.bf16 %v330, %v330
      %v347 = vpack.c.bf16 %v331, %v331
      %vm348 = vcmask 125952
      %349 = vst.msk [vmem:[%s172] sm:$0xf] %vm348, %v332
      %350 = vst.msk [vmem:[%s172 + $0x4] sm:$0xf] %vm348, %v333
      %351 = vst.msk [vmem:[%s172 + $0x8] sm:$0xf] %vm348, %v334
      %352 = vst.msk [vmem:[%s172 + $0xc] sm:$0xf] %vm348, %v335
      %353 = vst.msk [vmem:[%s172 + $0x10] sm:$0xf] %vm348, %v336
      %354 = vst.msk [vmem:[%s172 + $0x14] sm:$0xf] %vm348, %v337
      %355 = vst.msk [vmem:[%s172 + $0x18] sm:$0xf] %vm348, %v338
      %356 = vst.msk [vmem:[%s172 + $0x1c] sm:$0xf] %vm348, %v339
      %357 = vst.msk [vmem:[%s172 + $0x20] sm:$0xf] %vm348, %v340
      %358 = vst.msk [vmem:[%s172 + $0x24] sm:$0xf] %vm348, %v341
      %359 = vst.msk [vmem:[%s172 + $0x28] sm:$0xf] %vm348, %v342
      %360 = vst.msk [vmem:[%s172 + $0x2c] sm:$0xf] %vm348, %v343
      %361 = vst.msk [vmem:[%s172 + $0x30] sm:$0xf] %vm348, %v344
      %362 = vst.msk [vmem:[%s172 + $0x34] sm:$0xf] %vm348, %v345
      %363 = vst.msk [vmem:[%s172 + $0x38] sm:$0xf] %vm348, %v346
      %364 = vst.msk [vmem:[%s172 + $0x3c] sm:$0xf] %vm348, %v347
      %s365 = smul.u32 16, %s14
      %p366 = scmp.lt.s32.totalorder %s365, 31
      %s367 = scalar_select %p366, %s365, 31
      %s368 = smul.addr %s367, 4
      %s369 = scalar_lea.vmem %s3, %s368
      // Predicated region
      $region33: #{tpu_custom_call.1} parent=31 // pred_check
        %p370 = pneg %p100
      $region34: #{tpu_custom_call.1} parent=31 // pred_check_branch
        %372 = sbr.rel (%p370) target = $region36
      $region35: #{tpu_custom_call.1} parent=31 // pred_region
        %s373 = smul.u32 16, %s14
      $region36: #{tpu_custom_call.1} parent=31 // pred_fallthru
        _
    $region32: #{tpu_custom_call.1} parent=5 // pred_fallthru
      _
    %p374 = scmp.le.s32.totalorder 2, %s9
    // Predicated region
    $region37: #{tpu_custom_call.1} parent=5 // pred_check
      %p375 = pneg %p374
    $region38: #{tpu_custom_call.1} parent=5 // pred_check_branch
      %377 = sbr.rel (%p375) target = $region40
    $region39: #{tpu_custom_call.1} parent=5 // pred_region
      %s378 = ssub.s32 %s9, 2
      // Predicated region
      $region41: #{tpu_custom_call.1} parent=39 // pred_check
        %p379 = pneg %p106
      $region42: #{tpu_custom_call.1} parent=39 // pred_check_branch
        %381 = sbr.rel (%p379) target = $region44
      $region43: #{tpu_custom_call.1} parent=39 // pred_region
        %s382 = smul.u32 16, %s15
        %p383 = scmp.lt.s32.totalorder %s382, 31
        %s384 = scalar_select %p383, %s382, 31
        %s385 = smul.addr %s384, 4
        %s386 = scalar_lea.vmem %s3, %s385
      $region44: #{tpu_custom_call.1} parent=39 // pred_fallthru
        _
    $region40: #{tpu_custom_call.1} parent=5 // pred_fallthru
      _
  $region6: #{tpu_custom_call.1} parent=0 // loop_footer
    %s13 = sadd.s32 1, %s9
  $region7: #{tpu_custom_call.1} parent=0 // loop_footer_branch
    %8 = sbr.rel target = $region3
  $region8: #{tpu_custom_call.1} parent=0 // loop_exit
    _

</llo_original>
